<compile_context>
chip_gen: v7x
topology: tpu7x:2x2x1
jax: 0.10.0
libtpu: 0.0.40
codegen_flags: <defaults>
</compile_context>

<pallas_src>
import functools
import math

import jax
import jax.numpy as jnp
from jax.experimental import pallas as pl
from jax.experimental.pallas import tpu as pltpu


# ---------------------------------------------------------------------------
# Kernel body (three variants of the even/odd extraction).
# ---------------------------------------------------------------------------
def _rope_kernel(*refs, mode):
    if mode == "host_split":
        xe_ref, xo_ref, sc_ref, o_ref = refs            # xe/xo: (bt, ts, half)
        xe = xe_ref[...].astype(jnp.float32)
        xo = xo_ref[...].astype(jnp.float32)
    else:
        x_ref, sc_ref, o_ref = refs                      # x_ref: (bt, ts, d)
        half = sc_ref.shape[-1]
        if mode == "ref_stride":
            # Stride-2 lane loads directly from the VMEM block.
            xe = x_ref[:, :, pl.ds(0, half, stride=2)].astype(jnp.float32)
            xo = x_ref[:, :, pl.ds(1, half, stride=2)].astype(jnp.float32)
        else:  # "value_stride"
            xv = x_ref[...]
            xe = xv[:, :, 0::2].astype(jnp.float32)
            xo = xv[:, :, 1::2].astype(jnp.float32)

    half = sc_ref.shape[-1]
    sin = sc_ref[0].astype(jnp.float32)                  # (ts, half); broadcasts over bt
    cos = sc_ref[1].astype(jnp.float32)

    x1 = xe * cos - xo * sin
    x2 = xe * sin + xo * cos

    if half % 128 == 0:
        # Lane-dense half-width stores.
        o_ref[:, :, :half] = x1.astype(o_ref.dtype)
        o_ref[:, :, half:] = x2.astype(o_ref.dtype)
    else:
        # Avoid masked partial-lane stores for small model_dim: one full store.
        o_ref[...] = jnp.concatenate([x1, x2], axis=-1).astype(o_ref.dtype)


# ---------------------------------------------------------------------------
# Tiling / VMEM sizing (per TPU generation).
# ---------------------------------------------------------------------------
def _vmem_budget():
    try:
        cap = pltpu.get_tpu_info().vmem_capacity_bytes
    except Exception:
        cap = 64 * 1024 * 1024  # be conservative if the query is unavailable
    if cap >= 100 * 1024 * 1024:                   # v5e / v6e: 128 MiB physical
        return 40 * 1024 * 1024, 96 * 1024 * 1024  # (IO budget, vmem_limit_bytes)
    return 24 * 1024 * 1024, 48 * 1024 * 1024      # v7x: 64 MiB physical


def _pick_tiles(b, s, d, x_itemsize, table_itemsize):
    """Pick (batch_tile, seq_tile, vmem_limit) so double-buffered IO fits."""
    budget, vmem_limit = _vmem_budget()
    half = d // 2

    def step_bytes(bt, ts):
        io = bt * ts * d * (2 * x_itemsize)        # x in + out
        tab = 2 * ts * half * table_itemsize       # sin + cos
        return 2 * (io + tab)                      # double-buffered

    ts = min(2048, s)
    if ts < s:
        ts = max(8, (ts // 8) * 8)                 # sublane-aligned partial tiles
    bt = b
    while step_bytes(bt, ts) > budget:
        if bt > 1:
            bt = (bt + 1) // 2
        elif ts > 8:
            ts = max(8, ((ts // 2) // 8) * 8)
        else:
            break
    return bt, ts, vmem_limit


# ---------------------------------------------------------------------------
# pallas_call wrapper (one function, three modes).
# ---------------------------------------------------------------------------
def _rope_pallas(x, sincos, *, mode):
    b, s, d = x.shape
    half = d // 2
    bt, ts, vmem_limit = _pick_tiles(
        b, s, d, jnp.dtype(x.dtype).itemsize, jnp.dtype(sincos.dtype).itemsize)
    grid = (pl.cdiv(s, ts), pl.cdiv(b, bt))  # batch innermost -> table block reused

    table_spec = pl.BlockSpec((2, ts, half), lambda jt, ib: (0, jt, 0))
    out_spec = pl.BlockSpec((bt, ts, d), lambda jt, ib: (ib, jt, 0))

    if mode == "host_split":
        # Fallback: deinterleave in XLA (extra HBM traffic, but always lowers).
        operands = (x[..., 0::2], x[..., 1::2], sincos)
        in_specs = [
            pl.BlockSpec((bt, ts, half), lambda jt, ib: (ib, jt, 0)),
            pl.BlockSpec((bt, ts, half), lambda jt, ib: (ib, jt, 0)),
            table_spec,
        ]
        allow_fusion = [True, True, False]
    else:
        # Preferred: stream full x contiguously, deinterleave in-kernel.
        operands = (x, sincos)
        in_specs = [
            pl.BlockSpec((bt, ts, d), lambda jt, ib: (ib, jt, 0)),
            table_spec,
        ]
        allow_fusion = None

    return pl.pallas_call(
        functools.partial(_rope_kernel, mode=mode),
        out_shape=jax.ShapeDtypeStruct((b, s, d), x.dtype),
        grid=grid,
        in_specs=in_specs,
        out_specs=out_spec,
        compiler_params=pltpu.CompilerParams(
            dimension_semantics=("parallel", "parallel"),
            vmem_limit_bytes=vmem_limit,
            allow_input_fusion=allow_fusion,
        ),
    )(*operands)


# ---------------------------------------------------------------------------
# Cached sin/cos table (built once per (seq, dim), kept on device).
# TODO(synk): generate the table in-kernel from div_term + broadcasted_iota
# once Mosaic's sin/cos lowering is guaranteed; that would remove its HBM read.
# ---------------------------------------------------------------------------
_TABLE_CACHE = {}


def _table_dtype_name(x_dtype) -> str:
    return "float32" if jnp.dtype(x_dtype).itemsize >= 4 else "bfloat16"


def _sincos_table(s, d, dtype_name):
    key = (s, d, dtype_name)
    tab = _TABLE_CACHE.get(key)
    if tab is None:
        div_term = jnp.exp(
            jnp.arange(0, d, 2, dtype=jnp.float32) * -(math.log(10000.0) / d))
        position = jnp.arange(s, dtype=jnp.float32)[:, None]
        angles = position * div_term                               # (s, half)
        tab = jnp.stack([jnp.sin(angles), jnp.cos(angles)]).astype(
            jnp.dtype(dtype_name))                                 # (2, s, half)
        _TABLE_CACHE[key] = tab
    return tab


def _rope_reference(x):
    """Pure-JAX reference mirroring the PyTorch forward exactly."""
    b, s, d = x.shape
    div_term = jnp.exp(
        jnp.arange(0, d, 2, dtype=jnp.float32) * -(math.log(10000.0) / d))
    position = jnp.arange(s, dtype=jnp.float32)[:, None]
    sin_emb = jnp.sin(position * div_term)[None]
    cos_emb = jnp.cos(position * div_term)[None]
    x_even = x[..., 0::2].astype(jnp.float32)
    x_odd = x[..., 1::2].astype(jnp.float32)
    x1 = x_even * cos_emb - x_odd * sin_emb
    x2 = x_even * sin_emb + x_odd * cos_emb
    return jnp.concatenate([x1, x2], axis=-1).astype(x.dtype)


# ---------------------------------------------------------------------------
# Implementation selection: prefer in-kernel deinterleave, verified by a
# compile probe + tiny numeric check; otherwise use the known-good fallback.
# ---------------------------------------------------------------------------
_IMPL_CACHE = {}


def _get_impl(b, s, d, dtype_name):
    key = (b, s, d, dtype_name)
    impl = _IMPL_CACHE.get(key)
    if impl is not None:
        return impl

    dtype = jnp.dtype(dtype_name)
    tname = _table_dtype_name(dtype)
    x_spec = jax.ShapeDtypeStruct((b, s, d), dtype)
    t_spec = jax.ShapeDtypeStruct((2, s, d // 2), jnp.dtype(tname))
    tol = 1e-5 if dtype == jnp.dtype(jnp.float32) else 5e-2

    chosen = None
    for mode in ("ref_stride", "value_stride"):
        fn = jax.jit(functools.partial(_rope_pallas, mode=mode))
        try:
            fn.lower(x_spec, t_spec).compile()
            # Tiny numeric check so a silently-wrong lowering is never adopted.
            ss = min(s, 16)
            xs = jax.random.normal(jax.random.PRNGKey(1), (1, ss, d),
                                   dtype=jnp.float32).astype(dtype)
            got = fn(xs, _sincos_table(ss, d, tname))
            want = _rope_reference(xs)
            if bool(jnp.allclose(got.astype(jnp.float32),
                                 want.astype(jnp.float32), atol=tol, rtol=tol)):
                chosen = fn
                break
        except Exception:
            continue
    if chosen is None:
        chosen = jax.jit(functools.partial(_rope_pallas, mode="host_split"))
    _IMPL_CACHE[key] = chosen
    return chosen


def rotary_positional_embedding(x: jax.Array) -> jax.Array:
    """x: (batch, seq, model_dim). Returns RoPE(x), same shape/dtype."""
    b, s, d = x.shape
    assert d % 2 == 0, "model_dim must be even"
    table = _sincos_table(s, d, _table_dtype_name(x.dtype))
    impl = _get_impl(b, s, d, jnp.dtype(x.dtype).name)
    return impl(x, table)


if __name__ == "__main__":
    key = jax.random.PRNGKey(0)
    batch, seq, model_dim = 2, 8, 32
    x = jax.random.normal(key, (batch, seq, model_dim), dtype=jnp.float32)

    out = jax.block_until_ready(rotary_positional_embedding(x))
    ref = _rope_reference(x)

    assert out.shape == (batch, seq, model_dim)
    assert out.dtype == x.dtype
    assert jnp.allclose(out, ref, atol=1e-5, rtol=1e-5), "mismatch vs reference"

    print("KERNEL_OK")
</pallas_src>

<mosaic_0001>
module attributes {stable_mosaic.version = 11 : i64} {
  func.func @_rope_kernel(%arg0: i32, %arg1: i32, %arg2: memref<2x8x16xf32, #tpu.memory_space<vmem>>, %arg3: memref<2x8x16xf32, #tpu.memory_space<vmem>>, %arg4: memref<2x8x16xf32, #tpu.memory_space<vmem>>, %arg5: memref<2x8x32xf32, #tpu.memory_space<vmem>>) attributes {dimension_semantics = [#tpu.dimension_semantics<parallel>, #tpu.dimension_semantics<parallel>], iteration_bounds = array<i64: 1, 1>, scalar_prefetch = 0 : i64, scratch_operands = 0 : i64, tpu.core_type = #tpu.core_type<tc>, window_params = [{transform_indices = @transform_0, window_bounds = array<i64: 2, 8, 16>}, {transform_indices = @transform_1, window_bounds = array<i64: 2, 8, 16>}, {transform_indices = @transform_2, window_bounds = array<i64: 2, 8, 16>}, {transform_indices = @transform_3, window_bounds = array<i64: 2, 8, 32>}]} {
    %c0 = arith.constant 0 : index
    %c0_0 = arith.constant 0 : index
    %c0_1 = arith.constant 0 : index
    %0 = vector.load %arg2[%c0, %c0_0, %c0_1] : memref<2x8x16xf32, #tpu.memory_space<vmem>>, vector<2x8x16xf32>
    %c0_2 = arith.constant 0 : index
    %c0_3 = arith.constant 0 : index
    %c0_4 = arith.constant 0 : index
    %1 = vector.load %arg3[%c0_2, %c0_3, %c0_4] : memref<2x8x16xf32, #tpu.memory_space<vmem>>, vector<2x8x16xf32>
    %c0_5 = arith.constant 0 : index
    %c0_6 = arith.constant 0 : index
    %c0_7 = arith.constant 0 : index
    %2 = vector.load %arg4[%c0_5, %c0_6, %c0_7] : memref<2x8x16xf32, #tpu.memory_space<vmem>>, vector<1x8x16xf32>
    %3 = vector.shape_cast %2 : vector<1x8x16xf32> to vector<8x16xf32>
    %c1 = arith.constant 1 : index
    %c0_8 = arith.constant 0 : index
    %c0_9 = arith.constant 0 : index
    %4 = vector.load %arg4[%c1, %c0_8, %c0_9] : memref<2x8x16xf32, #tpu.memory_space<vmem>>, vector<1x8x16xf32>
    %5 = vector.shape_cast %4 : vector<1x8x16xf32> to vector<8x16xf32>
    %6 = vector.shape_cast %5 : vector<8x16xf32> to vector<1x8x16xf32>
    %7 = vector.broadcast %6 : vector<1x8x16xf32> to vector<2x8x16xf32>
    %8 = arith.mulf %0, %7 : vector<2x8x16xf32>
    %9 = vector.shape_cast %3 : vector<8x16xf32> to vector<1x8x16xf32>
    %10 = vector.broadcast %9 : vector<1x8x16xf32> to vector<2x8x16xf32>
    %11 = arith.mulf %1, %10 : vector<2x8x16xf32>
    %12 = arith.subf %8, %11 : vector<2x8x16xf32>
    %13 = vector.shape_cast %3 : vector<8x16xf32> to vector<1x8x16xf32>
    %14 = vector.broadcast %13 : vector<1x8x16xf32> to vector<2x8x16xf32>
    %15 = arith.mulf %0, %14 : vector<2x8x16xf32>
    %16 = vector.shape_cast %5 : vector<8x16xf32> to vector<1x8x16xf32>
    %17 = vector.broadcast %16 : vector<1x8x16xf32> to vector<2x8x16xf32>
    %18 = arith.mulf %1, %17 : vector<2x8x16xf32>
    %19 = arith.addf %15, %18 : vector<2x8x16xf32>
    %20 = tpu.concatenate %12, %19 in 2 : vector<2x8x16xf32>, vector<2x8x16xf32> -> vector<2x8x32xf32>
    %c0_10 = arith.constant 0 : index
    %c0_11 = arith.constant 0 : index
    %c0_12 = arith.constant 0 : index
    %21 = vector.load %arg5[%c0_10, %c0_11, %c0_12] : memref<2x8x32xf32, #tpu.memory_space<vmem>>, vector<2x8x32xf32>
    tpu.vector_store %arg5[%c0_10, %c0_11, %c0_12], %20 {strides = array<i32>} : memref<2x8x32xf32, #tpu.memory_space<vmem>>, vector<2x8x32xf32>,
    return
  }
  func.func @transform_0(%arg0: i32, %arg1: i32) -> (i32, i32, i32) {
    %c0_i32 = arith.constant 0 : i32
    %c0_i32_0 = arith.constant 0 : i32
    return %arg1, %arg0, %c0_i32 : i32, i32, i32
  }
  func.func @transform_1(%arg0: i32, %arg1: i32) -> (i32, i32, i32) {
    %c0_i32 = arith.constant 0 : i32
    %c0_i32_0 = arith.constant 0 : i32
    return %arg1, %arg0, %c0_i32 : i32, i32, i32
  }
  func.func @transform_2(%arg0: i32, %arg1: i32) -> (i32, i32, i32) {
    %c0_i32 = arith.constant 0 : i32
    %c0_i32_0 = arith.constant 0 : i32
    %c0_i32_1 = arith.constant 0 : i32
    return %c0_i32, %arg0, %c0_i32_0 : i32, i32, i32
  }
  func.func @transform_3(%arg0: i32, %arg1: i32) -> (i32, i32, i32) {
    %c0_i32 = arith.constant 0 : i32
    %c0_i32_0 = arith.constant 0 : i32
    return %arg1, %arg0, %c0_i32 : i32, i32, i32
  }
}

</mosaic_0001>

<llo_original>
// kernel: _rope_pallas.1
$region0: #{_rope_pallas.1}
  #allocation0 [shape = 'u32[]', space=smem, size = 0x4, offset = 0x4, fixed_abs, tag = 'smem constant byte address 0x4 - core index']
  #allocation1 [shape = 'u32[144,128]{1,0:T(1,128)}', space=vmem, size = 0x12000, scoped, tag = 'internal scratch']
  %s0 = inlined_call_operand.vmem [shape: f32[2,8,16], index: 0, kind: input, shape index: {}]
  %s1 = inlined_call_operand.vmem [shape: f32[2,8,16], index: 1, kind: input, shape index: {}]
  %s2 = inlined_call_operand.vmem [shape: f32[2,8,16], index: 2, kind: input, shape index: {}]
  %s3 = inlined_call_operand.hbm [shape: f32[2,8,32], index: 3, kind: output, shape index: {}]
  %s4 = sld [smem:[#allocation0]]
  $region22: #{_rope_pallas.1} parent=0
    _
  %s6 = ssub.s32 1, %s4
  %s7 = scalar_select 0, %s6, %s4
  $region1: #{_rope_pallas.1} parent=0
    #allocation2 [shape = 'u8[8192]{0}', space=vmem, size = 0x2000, scoped, tag = 'output window, operand 0, single buffered']
    #allocation3 [shape = 's32[1]{0}', space=sflag, size = 0x4, scoped, tag = 'scoped memory for _rope_pallas.1']
    %8 = vsyncpa [#allocation3], 0
    // Predicated region
    $region2: #{_rope_pallas.1} parent=1 // pred_check
      _
    $region3: #{_rope_pallas.1} parent=1 // pred_check_branch
      %10 = sbr.rel (0) target = $region5
    $region4: #{_rope_pallas.1} parent=1 // pred_region
      _
    $region5: #{_rope_pallas.1} parent=1 // pred_fallthru
      _
    // Predicated region
    $region6: #{_rope_pallas.1} parent=1 // pred_check
      _
    $region7: #{_rope_pallas.1} parent=1 // pred_check_branch
      %12 = sbr.rel (0) target = $region9
    $region8: #{_rope_pallas.1} parent=1 // pred_region
      _
    $region9: #{_rope_pallas.1} parent=1 // pred_fallthru
      _
    // Predicated region
    $region10: #{_rope_pallas.1} parent=1 // pred_check
      _
    $region11: #{_rope_pallas.1} parent=1 // pred_check_branch
      %14 = sbr.rel (0) target = $region13
    $region12: #{_rope_pallas.1} parent=1 // pred_region
      _
    $region13: #{_rope_pallas.1} parent=1 // pred_fallthru
      _
    %v15 = vld [vmem:[%s0] sm:$0xff]
    %v16 = vld [vmem:[%s0 + $0x8] sm:$0xff]
    %v17 = vld [vmem:[%s1] sm:$0xff]
    %v18 = vld [vmem:[%s1 + $0x8] sm:$0xff]
    %v19 = vld [vmem:[%s2] sm:$0xff]
    %s20 = scalar_lea.vmem %s2, 8
    %v21 = vld [vmem:[%s20] sm:$0xff]
    %v22 = vmul.f32 %v15, %v21
    %v23 = vmul.f32 %v16, %v21
    %v24 = vmul.f32 %v17, %v19
    %v25 = vmul.f32 %v18, %v19
    %v26 = vsub.f32 %v22, %v24
    %v27 = vsub.f32 %v23, %v25
    %v28 = vmul.f32 %v15, %v19
    %v29 = vmul.f32 %v16, %v19
    %v30 = vmul.f32 %v17, %v21
    %v31 = vmul.f32 %v18, %v21
    %v32 = vadd.f32 %v28, %v30
    %v33 = vadd.f32 %v29, %v31
    %36 = vrot.lane.b32.xlu0 %v32, 16
    %v37 = vpop.permute.xlu0 %36
    %38 = vrot.lane.b32.xlu0 %v33, 16
    %v39 = vpop.permute.xlu0 %38
    %vm42 = vcmask 130048
    %v43 = vsel %vm42, %v26, %v37
    %v44 = vsel %vm42, %v27, %v39
    %vm45 = vcmask 261120
    %46 = vst.msk [vmem:[#allocation2] sm:$0xff] %vm45, %v43
    %47 = vst.msk [vmem:[#allocation2 + $0x8] sm:$0xff] %vm45, %v44
    // Predicated region
    $region14: #{_rope_pallas.1} parent=1 // pred_check
      _
    $region15: #{_rope_pallas.1} parent=1 // pred_check_branch
      %49 = sbr.rel (0) target = $region17
    $region16: #{_rope_pallas.1} parent=1 // pred_region
      %s51 = ssub.s32 256, 256
      %52 = vsyncadd [#allocation3], %s51
      %s53 = sshll.u32 [#allocation2], 4
      %s54 = int_to_ptr.vmem [resolvable:$true] %s53
      %59 = dma.vmem_to_hbm [thread:$0]  %s54, 256, %s3, [#allocation3], 128, 128, 8
    $region17: #{_rope_pallas.1} parent=1 // pred_fallthru
      _
    // Predicated region
    $region18: #{_rope_pallas.1} parent=1 // pred_check
      _
    $region19: #{_rope_pallas.1} parent=1 // pred_check_branch
      %61 = sbr.rel (0) target = $region21
    $region20: #{_rope_pallas.1} parent=1 // pred_region
      %62 = dma.done [#allocation3], 256
    $region21: #{_rope_pallas.1} parent=1 // pred_fallthru
      _
    %63 = vsyncpa [#allocation3], 1

</llo_original>
